<compile_context>
chip_gen: v7x
topology: tpu7x:2x2x1
jax: 0.10.0
libtpu: 0.0.40
codegen_flags: <defaults>
</compile_context>

<pallas_src>
import numpy as np
import jax
import jax.numpy as jnp
from jax.experimental import pallas as pl
from jax.experimental.pallas import tpu as pltpu


def _round_up(x, m):
    return ((x + m - 1) // m) * m


def _vmem_budget_bytes():
    """Per-generation VMEM budget with headroom for compiler scratch."""
    try:
        cap = int(pltpu.get_tpu_info().vmem_capacity_bytes)
    except Exception:
        cap = 64 * 2 ** 20          # conservative (v7x physical VMEM)
    return max(int(cap * 0.80), 16 * 2 ** 20)


def _single_pass_vmem(tile_m, Cp, Hp, out_bytes=4):
    per_buf = (tile_m * Cp * 2        # x tile (bf16)
               + Cp * Hp * 2          # w1 (bf16, whole expert)
               + 8 * Hp * 4           # b1 (f32, sublane-padded)
               + Hp * Cp * 2          # w2 (bf16, whole expert)
               + 8 * Cp * 4           # b2 (f32)
               + tile_m * Cp * out_bytes)   # output tile
    return 2 * per_buf + tile_m * Hp * 4    # double-buffer + f32 intermediate headroom


def _chunked_vmem(tile_m, Cp, Hp, tk, out_bytes=4):
    per_buf = (tile_m * Cp * 2 + Cp * tk * 2 + 8 * tk * 4 + tk * Cp * 2
               + 8 * Cp * 4 + tile_m * Cp * out_bytes)
    return 2 * per_buf + tile_m * Cp * 4 + tile_m * tk * 4


# -----------------------------------------------------------------------------
# Pallas kernels: batched expert FFN   y = relu(x @ w1 + b1) @ w2 + b2
# -----------------------------------------------------------------------------
def _moe_ffn_single_kernel(x_ref, w1_ref, b1_ref, w2_ref, b2_ref, o_ref):
    # Whole-expert weights resident: no reduction axis, no accumulator scratch.
    h = jnp.dot(x_ref[...], w1_ref[...], preferred_element_type=jnp.float32)
    h = jnp.maximum(h + b1_ref[...], 0.0)
    y = jnp.dot(h.astype(jnp.bfloat16), w2_ref[...],
                preferred_element_type=jnp.float32)
    o_ref[...] = (y + b2_ref[...]).astype(o_ref.dtype)


def _moe_ffn_chunked_kernel(x_ref, w1_ref, b1_ref, w2_ref, b2_ref, o_ref, acc_ref):
    # Fallback when whole-expert weights do not fit VMEM: hidden dim chunked,
    # f32 VMEM accumulator seeded with b2 on the first chunk.
    h_idx = pl.program_id(2)

    @pl.when(h_idx == 0)
    def _init():
        acc_ref[...] = jnp.broadcast_to(b2_ref[...], acc_ref.shape).astype(jnp.float32)

    h = jnp.dot(x_ref[...], w1_ref[...], preferred_element_type=jnp.float32)
    h = jnp.maximum(h + b1_ref[...], 0.0)          # ReLU is elementwise -> chunking exact
    acc_ref[...] += jnp.dot(h.astype(jnp.bfloat16), w2_ref[...],
                            preferred_element_type=jnp.float32)

    @pl.when(h_idx == pl.num_programs(2) - 1)
    def _store():
        o_ref[...] = acc_ref[...].astype(o_ref.dtype)


def _expert_ffn_pallas(disp, w1, b1, w2, b2, *, tile_m):
    """disp: (E, rows, Cp) bf16 (already padded); w1: (E, Cp, Hp) bf16;
    b1: (E, 1, Hp) f32; w2: (E, Hp, Cp) bf16; b2: (E, 1, Cp) f32.
    Returns relu(disp @ w1 + b1) @ w2 + b2 as (E, rows, Cp) float32."""
    E, rows, Cp = disp.shape
    Hp = w1.shape[-1]
    assert rows % tile_m == 0 and Cp % 128 == 0 and Hp % 128 == 0

    budget = _vmem_budget_bytes()
    n_tiles = rows // tile_m

    # ---- single-pass variant: whole-expert weights resident in VMEM ----
    if _single_pass_vmem(tile_m, Cp, Hp) <= budget:
        cost = pl.CostEstimate(
            flops=int(4 * E * rows * Cp * Hp),
            transcendentals=0,
            bytes_accessed=int(disp.size * 2
                               + n_tiles * (w1.size * 2 + w2.size * 2
                                            + b1.size * 4 + b2.size * 4)
                               + E * rows * Cp * 4))
        return pl.pallas_call(
            _moe_ffn_single_kernel,
            out_shape=jax.ShapeDtypeStruct((E, rows, Cp), jnp.float32),
            grid_spec=pltpu.PrefetchScalarGridSpec(
                num_scalar_prefetch=0,
                grid=(E, n_tiles),
                in_specs=[
                    pl.BlockSpec((None, tile_m, Cp), lambda e, m: (e, m, 0)),
                    pl.BlockSpec((None, Cp, Hp), lambda e, m: (e, 0, 0)),
                    pl.BlockSpec((None, 1, Hp), lambda e, m: (e, 0, 0)),
                    pl.BlockSpec((None, Hp, Cp), lambda e, m: (e, 0, 0)),
                    pl.BlockSpec((None, 1, Cp), lambda e, m: (e, 0, 0)),
                ],
                out_specs=pl.BlockSpec((None, tile_m, Cp), lambda e, m: (e, m, 0)),
            ),
            compiler_params=pltpu.CompilerParams(
                dimension_semantics=("parallel", "parallel"),
                vmem_limit_bytes=budget),
            cost_estimate=cost,
        )(disp, w1, b1, w2, b2)

    # ---- chunked fallback: hidden dim split into the largest fitting chunk ----
    tk_h = 128
    for cand in range(Hp, 127, -128):            # largest 128-multiple divisor of Hp
        if Hp % cand == 0 and _chunked_vmem(tile_m, Cp, Hp, cand) <= budget:
            tk_h = cand
            break

    cost = pl.CostEstimate(
        flops=int(4 * E * rows * Cp * Hp),
        transcendentals=0,
        bytes_accessed=int(disp.size * 2
                           + n_tiles * (w1.size * 2 + w2.size * 2
                                        + b1.size * 4 + b2.size * 4)
                           + E * rows * Cp * 4))

    return pl.pallas_call(
        _moe_ffn_chunked_kernel,
        out_shape=jax.ShapeDtypeStruct((E, rows, Cp), jnp.float32),
        grid_spec=pltpu.PrefetchScalarGridSpec(
            num_scalar_prefetch=0,
            grid=(E, n_tiles, Hp // tk_h),
            in_specs=[
                pl.BlockSpec((None, tile_m, Cp), lambda e, m, h: (e, m, 0)),
                pl.BlockSpec((None, Cp, tk_h), lambda e, m, h: (e, 0, h)),
                pl.BlockSpec((None, 1, tk_h), lambda e, m, h: (e, 0, h)),
                pl.BlockSpec((None, tk_h, Cp), lambda e, m, h: (e, h, 0)),
                pl.BlockSpec((None, 1, Cp), lambda e, m, h: (e, 0, 0)),
            ],
            out_specs=pl.BlockSpec((None, tile_m, Cp), lambda e, m, h: (e, m, 0)),
            scratch_shapes=[pltpu.VMEM((tile_m, Cp), jnp.float32)],
        ),
        compiler_params=pltpu.CompilerParams(
            dimension_semantics=("parallel", "parallel", "arbitrary"),
            vmem_limit_bytes=budget),
        cost_estimate=cost,
    )(disp, w1, b1, w2, b2)


# -----------------------------------------------------------------------------
# One-time parameter preparation (pad to lane-dense shapes, cast matmul operands
# to bf16).  Do NOT call this per forward pass.
# -----------------------------------------------------------------------------
def prepare_expert_params(params):
    E, C, H = params["w1"].shape
    Cp, Hp = _round_up(C, 128), _round_up(H, 128)
    return {
        "w_gate": params["w_gate"], "b_gate": params["b_gate"],
        "w_noise": params["w_noise"], "b_noise": params["b_noise"],
        "w1": jnp.pad(params["w1"], ((0, 0), (0, Cp - C), (0, Hp - H))).astype(jnp.bfloat16),
        "b1": jnp.pad(params["b1"], ((0, 0), (0, Hp - H))).astype(jnp.float32).reshape(E, 1, Hp),
        "w2": jnp.pad(params["w2"], ((0, 0), (0, Hp - H), (0, Cp - C))).astype(jnp.bfloat16),
        "b2": jnp.pad(params["b2"], ((0, 0), (0, Cp - C))).astype(jnp.float32).reshape(E, 1, Cp),
        "E": E, "C": C, "H": H, "Cp": Cp, "Hp": Hp,
    }


# -----------------------------------------------------------------------------
# Router + dispatch + combine (plain XLA: tiny (M, E) matmuls, data-dependent
# gather/scatter on capacity-sized tables).
# -----------------------------------------------------------------------------
def _router(flat_x, params, noise_key, top_k):
    logits = flat_x @ params["w_gate"] + params["b_gate"]
    noise_logits = flat_x @ params["w_noise"] + params["b_noise"]
    noise = jax.random.normal(noise_key, logits.shape, logits.dtype) \
        * jax.nn.softplus(noise_logits)
    noisy = logits + noise
    full_probs = jax.nn.softmax(noisy, axis=-1)
    topk_vals, topk_idx = jax.lax.top_k(noisy, top_k)
    M = flat_x.shape[0]
    sparse_logits = jnp.full_like(noisy, -jnp.inf).at[
        jnp.arange(M)[:, None], topk_idx].set(topk_vals)
    router_probs = jax.nn.softmax(sparse_logits, axis=-1)
    return router_probs, topk_idx, full_probs


def sparse_moe_forward(x, prep, noise_key, *, top_k, capacity_factor=1.0, tile_m=256):
    """Eval-mode SparseMoE forward. `prep` comes from prepare_expert_params.
    Returns (output, entropy_loss=None)."""
    B, T, C = x.shape
    M = B * T
    E, Cp = prep["E"], prep["Cp"]
    assert C == prep["C"]
    flat_x = x.reshape(M, C)

    router_probs, topk_idx, _ = _router(flat_x, prep, noise_key, top_k)

    capacity = int(M * top_k / E * capacity_factor)   # matches torch int() truncation
    if capacity <= 0:
        return jnp.zeros_like(x), None

    # --- capacity-limited dispatch (ascending token order, like torch.nonzero) ---
    expert_ids = jnp.arange(E)
    tok_mask = (topk_idx[None, :, :] == expert_ids[:, None, None]).any(-1)   # (E, M)
    pos = jnp.cumsum(tok_mask.astype(jnp.int32), axis=1) - 1                 # slot per token
    accepted = tok_mask & (pos < capacity)

    # Full-height MXU tiles: rows is a multiple of 128 (padded slots gather the
    # zero sentinel row and are never read back by the combine).
    rows = max(_round_up(capacity, 128), 128)
    tile_m_eff = min(_round_up(tile_m, 128), rows)
    if rows % tile_m_eff:
        tile_m_eff = 128            # 128 always divides rows

    slot = jnp.where(accepted, pos, rows)             # out-of-range slot -> dropped
    token_idx = jnp.full((E, rows), M, dtype=jnp.int32)   # sentinel -> zero row of flat_x_pad
    token_idx = token_idx.at[expert_ids[:, None], slot].set(
        jnp.broadcast_to(jnp.arange(M, dtype=jnp.int32)[None, :], (E, M)), mode="drop")

    # Capacity-sized bf16 gather (no (E, M, C) broadcast, no per-call weight pad/cast).
    flat_x_pad = jnp.pad(flat_x, ((0, 1), (0, Cp - C)))     # extra zero row = sentinel
    disp = flat_x_pad[token_idx].astype(jnp.bfloat16)       # (E, rows, Cp)

    # --- batched expert FFN (Pallas kernel) ---
    expert_out = _expert_ffn_pallas(disp, prep["w1"], prep["b1"], prep["w2"], prep["b2"],
                                    tile_m=tile_m_eff)      # (E, rows, Cp) f32
    expert_out = expert_out[:, :, :C]

    # --- gated combine back to token order ---
    row_ids = jnp.arange(M)
    acc_mk = accepted[topk_idx, row_ids[:, None]]                    # (M, K)
    slot_mk = jnp.where(acc_mk, pos[topk_idx, row_ids[:, None]], 0)
    gate_mk = router_probs[row_ids[:, None], topk_idx]               # (M, K)
    gathered = expert_out[topk_idx, slot_mk]                         # (M, K, C)
    combined = jnp.sum(gathered * (gate_mk * acc_mk)[..., None], axis=1)

    out = combined.reshape(B, T, C).astype(x.dtype)
    # TODO(synk): router-entropy aux loss only exists in training mode.
    return out, None


# -----------------------------------------------------------------------------
# Plain-JAX reference mirroring the PyTorch loop (eval mode), using the same
# bf16 operand casting as the kernel so numerics are directly comparable.
# -----------------------------------------------------------------------------
def sparse_moe_reference(x, params, noise_key, *, top_k, capacity_factor=1.0):
    B, T, C = x.shape
    M = B * T
    E = params["w1"].shape[0]
    flat_x = x.reshape(M, C)
    router_probs, topk_idx, _ = _router(flat_x, params, noise_key, top_k)
    capacity = int(M * top_k / E * capacity_factor)
    updates = jnp.zeros((M, C), jnp.float32)
    topk_np = np.asarray(topk_idx)
    for e in range(E):
        mask = (topk_np == e).any(axis=-1)
        sel = np.nonzero(mask)[0][:capacity]
        if sel.size == 0:
            continue
        xe = flat_x[sel].astype(jnp.bfloat16)
        w1 = params["w1"][e].astype(jnp.bfloat16)
        w2 = params["w2"][e].astype(jnp.bfloat16)
        h = jnp.dot(xe, w1, preferred_element_type=jnp.float32) + params["b1"][e]
        h = jnp.maximum(h, 0.0)
        y = jnp.dot(h.astype(jnp.bfloat16), w2,
                    preferred_element_type=jnp.float32) + params["b2"][e]
        gate = router_probs[sel, e][:, None]
        updates = updates.at[sel].add(y * gate)
    return updates.reshape(B, T, C)


def init_params(key, n_embed, num_experts, dtype=jnp.float32):
    """torch.nn.Linear-style uniform init; expert weights stored as (in, out)."""
    H = 4 * n_embed
    keys = jax.random.split(key, 8)

    def lin(k, fan_in, shape):
        bound = 1.0 / (fan_in ** 0.5)
        return jax.random.uniform(k, shape, dtype, -bound, bound)

    return {
        "w_gate": lin(keys[0], n_embed, (n_embed, num_experts)),
        "b_gate": lin(keys[1], n_embed, (num_experts,)),
        "w_noise": lin(keys[2], n_embed, (n_embed, num_experts)),
        "b_noise": lin(keys[3], n_embed, (num_experts,)),
        "w1": lin(keys[4], n_embed, (num_experts, n_embed, H)),
        "b1": lin(keys[5], n_embed, (num_experts, H)),
        "w2": lin(keys[6], H, (num_experts, H, n_embed)),
        "b2": lin(keys[7], H, (num_experts, n_embed)),
    }


if __name__ == "__main__":
    key = jax.random.PRNGKey(0)
    k_x, k_p, k_noise = jax.random.split(key, 3)

    batch, seq, n_embed = 2, 8, 32
    num_experts, top_k = 4, 2

    x = jax.random.normal(k_x, (batch, seq, n_embed), dtype=jnp.float32)
    params = init_params(k_p, n_embed, num_experts)
    prep = prepare_expert_params(params)     # one-time pad/cast of expert weights

    out, entropy_loss = sparse_moe_forward(x, prep, k_noise,
                                           top_k=top_k, capacity_factor=1.0)
    out = jax.block_until_ready(out)

    assert out.shape == x.shape
    assert entropy_loss is None  # eval-mode semantics

    ref = sparse_moe_reference(x, params, k_noise, top_k=top_k, capacity_factor=1.0)
    max_err = float(jnp.max(jnp.abs(out - ref)))
    assert jnp.allclose(out, ref, atol=2e-3, rtol=2e-3), max_err

    print("KERNEL_OK")
</pallas_src>

<mosaic_0001>
module attributes {stable_mosaic.version = 11 : i64} {
  func.func @_moe_ffn_single_kernel(%arg0: i32, %arg1: i32, %arg2: memref<1x128x128xbf16, #tpu.memory_space<vmem>>, %arg3: memref<1x128x128xbf16, #tpu.memory_space<vmem>>, %arg4: memref<1x1x128xf32, #tpu.memory_space<vmem>>, %arg5: memref<1x128x128xbf16, #tpu.memory_space<vmem>>, %arg6: memref<1x1x128xf32, #tpu.memory_space<vmem>>, %arg7: memref<1x128x128xf32, #tpu.memory_space<vmem>>) attributes {dimension_semantics = [#tpu.dimension_semantics<parallel>, #tpu.dimension_semantics<parallel>], iteration_bounds = array<i64: 4, 1>, scalar_prefetch = 0 : i64, scratch_operands = 0 : i64, tpu.core_type = #tpu.core_type<tc>, window_params = [{transform_indices = @transform_0, window_bounds = array<i64: 1, 128, 128>}, {transform_indices = @transform_1, window_bounds = array<i64: 1, 128, 128>}, {transform_indices = @transform_2, window_bounds = array<i64: 1, 1, 128>}, {transform_indices = @transform_3, window_bounds = array<i64: 1, 128, 128>}, {transform_indices = @transform_4, window_bounds = array<i64: 1, 1, 128>}, {transform_indices = @transform_5, window_bounds = array<i64: 1, 128, 128>}]} {
    %c0 = arith.constant 0 : index
    %c0_0 = arith.constant 0 : index
    %c0_1 = arith.constant 0 : index
    %0 = vector.load %arg2[%c0, %c0_0, %c0_1] : memref<1x128x128xbf16, #tpu.memory_space<vmem>>, vector<1x128x128xbf16>
    %1 = vector.shape_cast %0 : vector<1x128x128xbf16> to vector<128x128xbf16>
    %c0_2 = arith.constant 0 : index
    %c0_3 = arith.constant 0 : index
    %c0_4 = arith.constant 0 : index
    %2 = vector.load %arg3[%c0_2, %c0_3, %c0_4] : memref<1x128x128xbf16, #tpu.memory_space<vmem>>, vector<1x128x128xbf16>
    %3 = vector.shape_cast %2 : vector<1x128x128xbf16> to vector<128x128xbf16>
    %cst = arith.constant dense<0.000000e+00> : vector<128x128xf32>
    %4 = tpu.matmul %1, %3, %cst {dimension_numbers = #tpu.dot_dimension_numbers<[1], [0], [0], [1], [0, 0, 1, 1], [], []>} : vector<128x128xbf16>, vector<128x128xbf16>, vector<128x128xf32> -> vector<128x128xf32>
    %c0_5 = arith.constant 0 : index
    %c0_6 = arith.constant 0 : index
    %c0_7 = arith.constant 0 : index
    %5 = vector.load %arg4[%c0_5, %c0_6, %c0_7] : memref<1x1x128xf32, #tpu.memory_space<vmem>>, vector<1x1x128xf32>
    %6 = vector.shape_cast %5 : vector<1x1x128xf32> to vector<1x128xf32>
    %7 = vector.broadcast %6 : vector<1x128xf32> to vector<128x128xf32>
    %8 = arith.addf %4, %7 : vector<128x128xf32>
    %cst_8 = arith.constant 0.000000e+00 : f32
    %9 = vector.broadcast %cst_8 : f32 to vector<128x128xf32>
    %10 = arith.maximumf %8, %9 : vector<128x128xf32>
    %11 = arith.truncf %10 : vector<128x128xf32> to vector<128x128xbf16>
    %c0_9 = arith.constant 0 : index
    %c0_10 = arith.constant 0 : index
    %c0_11 = arith.constant 0 : index
    %12 = vector.load %arg5[%c0_9, %c0_10, %c0_11] : memref<1x128x128xbf16, #tpu.memory_space<vmem>>, vector<1x128x128xbf16>
    %13 = vector.shape_cast %12 : vector<1x128x128xbf16> to vector<128x128xbf16>
    %cst_12 = arith.constant dense<0.000000e+00> : vector<128x128xf32>
    %14 = tpu.matmul %11, %13, %cst_12 {dimension_numbers = #tpu.dot_dimension_numbers<[1], [0], [0], [1], [0, 0, 1, 1], [], []>} : vector<128x128xbf16>, vector<128x128xbf16>, vector<128x128xf32> -> vector<128x128xf32>
    %c0_13 = arith.constant 0 : index
    %c0_14 = arith.constant 0 : index
    %c0_15 = arith.constant 0 : index
    %15 = vector.load %arg6[%c0_13, %c0_14, %c0_15] : memref<1x1x128xf32, #tpu.memory_space<vmem>>, vector<1x1x128xf32>
    %16 = vector.shape_cast %15 : vector<1x1x128xf32> to vector<1x128xf32>
    %17 = vector.broadcast %16 : vector<1x128xf32> to vector<128x128xf32>
    %18 = arith.addf %14, %17 : vector<128x128xf32>
    %c0_16 = arith.constant 0 : index
    %c0_17 = arith.constant 0 : index
    %c0_18 = arith.constant 0 : index
    %19 = vector.load %arg7[%c0_16, %c0_17, %c0_18] : memref<1x128x128xf32, #tpu.memory_space<vmem>>, vector<1x128x128xf32>
    %20 = vector.shape_cast %19 : vector<1x128x128xf32> to vector<128x128xf32>
    %21 = vector.shape_cast %18 : vector<128x128xf32> to vector<1x128x128xf32>
    tpu.vector_store %arg7[%c0_16, %c0_17, %c0_18], %21 {strides = array<i32>} : memref<1x128x128xf32, #tpu.memory_space<vmem>>, vector<1x128x128xf32>,
    return
  }
  func.func @transform_0(%arg0: i32, %arg1: i32) -> (i32, i32, i32) {
    %c0_i32 = arith.constant 0 : i32
    %c0_i32_0 = arith.constant 0 : i32
    return %arg0, %arg1, %c0_i32 : i32, i32, i32
  }
  func.func @transform_1(%arg0: i32, %arg1: i32) -> (i32, i32, i32) {
    %c0_i32 = arith.constant 0 : i32
    %c0_i32_0 = arith.constant 0 : i32
    %c0_i32_1 = arith.constant 0 : i32
    return %arg0, %c0_i32, %c0_i32_0 : i32, i32, i32
  }
  func.func @transform_2(%arg0: i32, %arg1: i32) -> (i32, i32, i32) {
    %c0_i32 = arith.constant 0 : i32
    %c0_i32_0 = arith.constant 0 : i32
    %c0_i32_1 = arith.constant 0 : i32
    return %arg0, %c0_i32, %c0_i32_0 : i32, i32, i32
  }
  func.func @transform_3(%arg0: i32, %arg1: i32) -> (i32, i32, i32) {
    %c0_i32 = arith.constant 0 : i32
    %c0_i32_0 = arith.constant 0 : i32
    %c0_i32_1 = arith.constant 0 : i32
    return %arg0, %c0_i32, %c0_i32_0 : i32, i32, i32
  }
  func.func @transform_4(%arg0: i32, %arg1: i32) -> (i32, i32, i32) {
    %c0_i32 = arith.constant 0 : i32
    %c0_i32_0 = arith.constant 0 : i32
    %c0_i32_1 = arith.constant 0 : i32
    return %arg0, %c0_i32, %c0_i32_0 : i32, i32, i32
  }
  func.func @transform_5(%arg0: i32, %arg1: i32) -> (i32, i32, i32) {
    %c0_i32 = arith.constant 0 : i32
    %c0_i32_0 = arith.constant 0 : i32
    return %arg0, %arg1, %c0_i32 : i32, i32, i32
  }
}

</mosaic_0001>

<llo_original>
// kernel: tpu_custom_call.1
$region0: #{tpu_custom_call.1}
  #allocation0 [shape = 'u32[]', space=smem, size = 0x4, offset = 0x4, fixed_abs, tag = 'smem constant byte address 0x4 - core index']
  #allocation1 [shape = 'u32[144,128]{1,0:T(1,128)}', space=vmem, size = 0x12000, scoped, tag = 'internal scratch']
  %s0 = inlined_call_operand.hbm [shape: bf16[4,128,128], index: 0, kind: input, shape index: {}]
  %s1 = inlined_call_operand.hbm [shape: bf16[4,128,128], index: 1, kind: input, shape index: {}]
  %s2 = inlined_call_operand.vmem [shape: f32[4,1,128], index: 2, kind: input, shape index: {}]
  %s3 = inlined_call_operand.hbm [shape: bf16[4,128,128], index: 3, kind: input, shape index: {}]
  %s4 = inlined_call_operand.vmem [shape: f32[4,1,128], index: 4, kind: input, shape index: {}]
  %s5 = inlined_call_operand.hbm [shape: f32[4,128,128], index: 5, kind: output, shape index: {}]
  %s6 = sld [smem:[#allocation0]]
  $region65: #{tpu_custom_call.1} parent=0
    _
  %s8 = ssub.s32 1, %s6
  %s9 = scalar_select 0, %s8, %s6
  $region1: #{tpu_custom_call.1} parent=0
    #allocation2 [shape = 'u8[65536]{0}', space=vmem, size = 0x10000, scoped, tag = 'input window, operand 0']
    #allocation3 [shape = 's32[2]{0}', space=sflag, size = 0x8, scoped, tag = 'scoped memory for tpu_custom_call.1']
    #allocation4 [shape = 's32[2]{0}', space=sflag, size = 0x8, scoped, tag = 'scoped memory for tpu_custom_call.1']
    #allocation5 [shape = 'u8[65536]{0}', space=vmem, size = 0x10000, scoped, tag = 'input window, operand 1']
    #allocation6 [shape = 's32[2]{0}', space=sflag, size = 0x8, scoped, tag = 'scoped memory for tpu_custom_call.1']
    #allocation7 [shape = 'u8[65536]{0}', space=vmem, size = 0x10000, scoped, tag = 'input window, operand 3']
    #allocation8 [shape = 'u8[131072]{0}', space=vmem, size = 0x20000, scoped, tag = 'output window, operand 0']
    %10 = vsyncpa [#allocation3], 0
    %s11 = scalar_lea.sflag [#allocation3], 1
    %12 = vsyncpa %s11, 0
    %13 = vsyncpa [#allocation6], 0
    %s14 = scalar_lea.sflag [#allocation6], 1
    %15 = vsyncpa %s14, 0
    %16 = vsyncpa [#allocation4], 0
    %s17 = scalar_lea.sflag [#allocation4], 1
    %18 = vsyncpa %s17, 0
    loop: start=0, step=1, limit=6
    $region2: #{tpu_custom_call.1} parent=1 // loop_pre_header
      _
    $region3: #{tpu_custom_call.1} parent=1 // loop_header
      %s20 = sphi 0, %s24
      %p21 = scmp.ge.s32.totalorder %s20, 6
      %s27 = sphi 0, %s39
      %s28 = sphi 0, %s35
      %s29 = sphi 0, %s27
      %s30 = sphi 0, %s28
      %s31 = sphi 0, %s29
      %s32 = sphi 0, %s30
      %s44 = sphi 0, %s46
      %s47 = sphi 0, %s44
      %s48 = sphi 0, %s47
      %s64 = sphi 0, %s48
      %s70 = sphi 0, %s72
      %s73 = sphi 0, %s70
      %s74 = sphi 0, %s73
      %s90 = sphi 0, %s74
      %s96 = sphi 0, %s98
      %s99 = sphi 0, %s96
      %s100 = sphi 0, %s99
      %s116 = sphi 0, %s100
      %s122 = sphi 0, %s124
      %s125 = sphi 0, %s122
      %s126 = sphi 0, %s125
      %s142 = sphi 0, %s126
      %s148 = sphi 0, %s150
      %s151 = sphi 0, %s148
      %s152 = sphi 0, %s151
      %s168 = sphi 0, %s152
      %s176 = sphi 0, %s178
      %s179 = sphi 0, %s176
      %s180 = sphi 0, %s179
      %s196 = sphi 0, %s180
    $region4: #{tpu_custom_call.1} parent=1 // loop_header_branch
      %23 = sbr.rel (%p21) target = $region8
    $region5: #{tpu_custom_call.1} parent=1 // loop_body
      %s25 = ssub.s32 %s20, 1
      %s26 = ssub.s32 %s20, 2
      %s33 = sadd.s32 1, %s28
      %p34 = scmp.ge.s32.totalorder %s33, 1
      %s35 = scalar_select %p34, 0, %s33
      %s36 = sadd.s32 1, %s27
      %s37 = scalar_select %p34, %s36, %s27
      %p38 = scmp.ge.s32.totalorder %s37, 4
      %s39 = scalar_select %p38, 0, %s37
      %s40 = ssub.s32 %s27, %s39
      %s41 = ssub.s32 %s28, %s35
      %s42 = sor.u32 %s40, %s41
      %p43 = scmp.eq.s32.totalorder %s42, 0
      %s45 = sadd.s32 %s44, 1
      %s46 = scalar_select %p43, %s44, %s45
      %p49 = pneg %p43
      %p50 = scmp.eq.s32.totalorder %s20, 3
      %p51 = por %p49, %p50
      %p52 = scmp.ne.s32.totalorder %s44, %s47
      %p53 = scmp.eq.s32.totalorder %s20, 0
      %p54 = por %p52, %p53
      %p55 = scmp.ne.s32.totalorder %s44, %s47
      %p56 = scmp.eq.s32.totalorder %s25, 3
      %p57 = por %p55, %p56
      %p58 = scmp.ne.s32.totalorder %s47, %s48
      %p59 = scmp.eq.s32.totalorder %s25, 0
      %p60 = por %p58, %p59
      %p61 = scmp.ne.s32.totalorder %s47, %s48
      %p62 = scmp.eq.s32.totalorder %s26, 3
      %p63 = por %p61, %p62
      %p65 = scmp.ne.s32.totalorder %s48, %s64
      %p66 = scmp.eq.s32.totalorder %s26, 0
      %p67 = por %p65, %p66
      %s68 = ssub.s32 %s27, %s39
      %p69 = scmp.eq.s32.totalorder %s68, 0
      %s71 = sadd.s32 %s70, 1
      %s72 = scalar_select %p69, %s70, %s71
      %p75 = pneg %p69
      %p76 = scmp.eq.s32.totalorder %s20, 3
      %p77 = por %p75, %p76
      %p78 = scmp.ne.s32.totalorder %s70, %s73
      %p79 = scmp.eq.s32.totalorder %s20, 0
      %p80 = por %p78, %p79
      %p81 = scmp.ne.s32.totalorder %s70, %s73
      %p82 = scmp.eq.s32.totalorder %s25, 3
      %p83 = por %p81, %p82
      %p84 = scmp.ne.s32.totalorder %s73, %s74
      %p85 = scmp.eq.s32.totalorder %s25, 0
      %p86 = por %p84, %p85
      %p87 = scmp.ne.s32.totalorder %s73, %s74
      %p88 = scmp.eq.s32.totalorder %s26, 3
      %p89 = por %p87, %p88
      %p91 = scmp.ne.s32.totalorder %s74, %s90
      %p92 = scmp.eq.s32.totalorder %s26, 0
      %p93 = por %p91, %p92
      %s94 = ssub.s32 %s27, %s39
      %p95 = scmp.eq.s32.totalorder %s94, 0
      %s97 = sadd.s32 %s96, 1
      %s98 = scalar_select %p95, %s96, %s97
      %p101 = pneg %p95
      %p102 = scmp.eq.s32.totalorder %s20, 3
      %p103 = por %p101, %p102
      %p104 = scmp.ne.s32.totalorder %s96, %s99
      %p105 = scmp.eq.s32.totalorder %s20, 0
      %p106 = por %p104, %p105
      %p107 = scmp.ne.s32.totalorder %s96, %s99
      %p108 = scmp.eq.s32.totalorder %s25, 3
      %p109 = por %p107, %p108
      %p110 = scmp.ne.s32.totalorder %s99, %s100
      %p111 = scmp.eq.s32.totalorder %s25, 0
      %p112 = por %p110, %p111
      %p113 = scmp.ne.s32.totalorder %s99, %s100
      %p114 = scmp.eq.s32.totalorder %s26, 3
      %p115 = por %p113, %p114
      %p117 = scmp.ne.s32.totalorder %s100, %s116
      %p118 = scmp.eq.s32.totalorder %s26, 0
      %p119 = por %p117, %p118
      %s120 = ssub.s32 %s27, %s39
      %p121 = scmp.eq.s32.totalorder %s120, 0
      %s123 = sadd.s32 %s122, 1
      %s124 = scalar_select %p121, %s122, %s123
      %p127 = pneg %p121
      %p128 = scmp.eq.s32.totalorder %s20, 3
      %p129 = por %p127, %p128
      %p130 = scmp.ne.s32.totalorder %s122, %s125
      %p131 = scmp.eq.s32.totalorder %s20, 0
      %p132 = por %p130, %p131
      %p133 = scmp.ne.s32.totalorder %s122, %s125
      %p134 = scmp.eq.s32.totalorder %s25, 3
      %p135 = por %p133, %p134
      %p136 = scmp.ne.s32.totalorder %s125, %s126
      %p137 = scmp.eq.s32.totalorder %s25, 0
      %p138 = por %p136, %p137
      %p139 = scmp.ne.s32.totalorder %s125, %s126
      %p140 = scmp.eq.s32.totalorder %s26, 3
      %p141 = por %p139, %p140
      %p143 = scmp.ne.s32.totalorder %s126, %s142
      %p144 = scmp.eq.s32.totalorder %s26, 0
      %p145 = por %p143, %p144
      %s146 = ssub.s32 %s27, %s39
      %p147 = scmp.eq.s32.totalorder %s146, 0
      %s149 = sadd.s32 %s148, 1
      %s150 = scalar_select %p147, %s148, %s149
      %p153 = pneg %p147
      %p154 = scmp.eq.s32.totalorder %s20, 3
      %p155 = por %p153, %p154
      %p156 = scmp.ne.s32.totalorder %s148, %s151
      %p157 = scmp.eq.s32.totalorder %s20, 0
      %p158 = por %p156, %p157
      %p159 = scmp.ne.s32.totalorder %s148, %s151
      %p160 = scmp.eq.s32.totalorder %s25, 3
      %p161 = por %p159, %p160
      %p162 = scmp.ne.s32.totalorder %s151, %s152
      %p163 = scmp.eq.s32.totalorder %s25, 0
      %p164 = por %p162, %p163
      %p165 = scmp.ne.s32.totalorder %s151, %s152
      %p166 = scmp.eq.s32.totalorder %s26, 3
      %p167 = por %p165, %p166
      %p169 = scmp.ne.s32.totalorder %s152, %s168
      %p170 = scmp.eq.s32.totalorder %s26, 0
      %p171 = por %p169, %p170
      %s172 = ssub.s32 %s27, %s39
      %s173 = ssub.s32 %s28, %s35
      %s174 = sor.u32 %s172, %s173
      %p175 = scmp.eq.s32.totalorder %s174, 0
      %s177 = sadd.s32 %s176, 1
      %s178 = scalar_select %p175, %s176, %s177
      %p181 = pneg %p175
      %p182 = scmp.eq.s32.totalorder %s20, 3
      %p183 = por %p181, %p182
      %p184 = scmp.ne.s32.totalorder %s176, %s179
      %p185 = scmp.eq.s32.totalorder %s20, 0
      %p186 = por %p184, %p185
      %p187 = scmp.ne.s32.totalorder %s176, %s179
      %p188 = scmp.eq.s32.totalorder %s25, 3
      %p189 = por %p187, %p188
      %p190 = scmp.ne.s32.totalorder %s179, %s180
      %p191 = scmp.eq.s32.totalorder %s25, 0
      %p192 = por %p190, %p191
      %p193 = scmp.ne.s32.totalorder %s179, %s180
      %p194 = scmp.eq.s32.totalorder %s26, 3
      %p195 = por %p193, %p194
      %p197 = scmp.ne.s32.totalorder %s180, %s196
      %p198 = scmp.eq.s32.totalorder %s26, 0
      %p199 = por %p197, %p198
      %p200 = scmp.le.s32.totalorder 1, %s20
      %p201 = scmp.lt.s32.totalorder %s20, 5
      %p202 = pnand %p200, %p201
      %p203 = pneg %p202
      // Predicated region
      $region9: #{tpu_custom_call.1} parent=5 // pred_check
        _
      $region10: #{tpu_custom_call.1} parent=5 // pred_check_branch
        %205 = sbr.rel (%p202) target = $region12
      $region11: #{tpu_custom_call.1} parent=5 // pred_region
        %s206 = ssub.s32 %s20, 1
      $region12: #{tpu_custom_call.1} parent=5 // pred_fallthru
        _
      %p207 = scmp.lt.s32.totalorder %s20, 4
      // Predicated region
      $region13: #{tpu_custom_call.1} parent=5 // pred_check
        %p208 = pneg %p207
      $region14: #{tpu_custom_call.1} parent=5 // pred_check_branch
        %210 = sbr.rel (%p208) target = $region16
      $region15: #{tpu_custom_call.1} parent=5 // pred_region
        // Predicated region
        $region17: #{tpu_custom_call.1} parent=15 // pred_check
          %p211 = pneg %p54
        $region18: #{tpu_custom_call.1} parent=15 // pred_check_branch
          %213 = sbr.rel (%p211) target = $region20
        $region19: #{tpu_custom_call.1} parent=15 // pred_region
          %s214 = sand.u32 %s44, 1
          %s215 = scalar_lea.sflag [#allocation3], %s214
          %s216 = sand.u32 %s44, 1
          %s217 = smul.addr %s216, 64
          %s218 = scalar_lea.vmem [#allocation2], %s217
          %s219 = smul.u32 16, %s28
          %s221 = ssub.s32 1024, 1024
          %222 = vsyncadd %s215, %s221
          %s223 = smul.addr %s27, 16
          %s224 = sadd.s32 %s219, %s223
          %s225 = smul.addr %s224, 64
          %s226 = scalar_lea.hbm %s0, %s225
          %s227 = sshll.u32 %s218, 4
          %s228 = int_to_ptr.vmem [resolvable:$true] %s227
          %233 = dma.hbm_to_vmem [thread:$0]  %s226, 1024, %s228, %s215, 64, 64, 4
        $region20: #{tpu_custom_call.1} parent=15 // pred_fallthru
          _
        // Predicated region
        $region21: #{tpu_custom_call.1} parent=15 // pred_check
          %p234 = pneg %p80
        $region22: #{tpu_custom_call.1} parent=15 // pred_check_branch
          %236 = sbr.rel (%p234) target = $region24
        $region23: #{tpu_custom_call.1} parent=15 // pred_region
          %s237 = sand.u32 %s20, 1
          %s238 = scalar_lea.sflag [#allocation6], %s237
          %s239 = sand.u32 %s70, 1
          %s240 = smul.addr %s239, 64
          %s241 = scalar_lea.vmem [#allocation5], %s240
          %s243 = ssub.s32 1024, 1024
          %244 = vsyncadd %s238, %s243
          %s245 = smul.addr %s27, 16
          %s246 = smul.addr %s245, 64
          %s247 = scalar_lea.hbm %s1, %s246
          %s248 = sshll.u32 %s241, 4
          %s249 = int_to_ptr.vmem [resolvable:$true] %s248
          %254 = dma.hbm_to_vmem [thread:$0]  %s247, 1024, %s249, %s238, 64, 64, 4
        $region24: #{tpu_custom_call.1} parent=15 // pred_fallthru
          _
        // Predicated region
        $region25: #{tpu_custom_call.1} parent=15 // pred_check
          %p255 = pneg %p106
        $region26: #{tpu_custom_call.1} parent=15 // pred_check_branch
          %257 = sbr.rel (%p255) target = $region28
        $region27: #{tpu_custom_call.1} parent=15 // pred_region
          %p258 = scmp.lt.s32.totalorder %s27, 3
          %s259 = scalar_select %p258, %s27, 3
          %s260 = scalar_lea.vmem %s2, %s259
        $region28: #{tpu_custom_call.1} parent=15 // pred_fallthru
          _
        // Predicated region
        $region29: #{tpu_custom_call.1} parent=15 // pred_check
          %p261 = pneg %p132
        $region30: #{tpu_custom_call.1} parent=15 // pred_check_branch
          %263 = sbr.rel (%p261) target = $region32
        $region31: #{tpu_custom_call.1} parent=15 // pred_region
          %s264 = sand.u32 %s20, 1
          %s265 = scalar_lea.sflag [#allocation6], %s264
          %s266 = sand.u32 %s122, 1
          %s267 = smul.addr %s266, 64
          %s268 = scalar_lea.vmem [#allocation7], %s267
          %s270 = ssub.s32 1024, 1024
          %271 = vsyncadd %s265, %s270
          %s272 = smul.addr %s27, 16
          %s273 = smul.addr %s272, 64
          %s274 = scalar_lea.hbm %s3, %s273
          %s275 = sshll.u32 %s268, 4
          %s276 = int_to_ptr.vmem [resolvable:$true] %s275
          %281 = dma.hbm_to_vmem [thread:$0]  %s274, 1024, %s276, %s265, 64, 64, 4
        $region32: #{tpu_custom_call.1} parent=15 // pred_fallthru
          _
        // Predicated region
        $region33: #{tpu_custom_call.1} parent=15 // pred_check
          %p282 = pneg %p158
        $region34: #{tpu_custom_call.1} parent=15 // pred_check_branch
          %284 = sbr.rel (%p282) target = $region36
        $region35: #{tpu_custom_call.1} parent=15 // pred_region
          %p285 = scmp.lt.s32.totalorder %s27, 3
          %s286 = scalar_select %p285, %s27, 3
          %s287 = scalar_lea.vmem %s4, %s286
        $region36: #{tpu_custom_call.1} parent=15 // pred_fallthru
          _
      $region16: #{tpu_custom_call.1} parent=5 // pred_fallthru
        _
      %p288 = scmp.le.s32.totalorder 1, %s20
      %p289 = scmp.lt.s32.totalorder %s20, 5
      %p290 = pnand %p288, %p289
      %p291 = pneg %p290
      // Predicated region
      $region37: #{tpu_custom_call.1} parent=5 // pred_check
        _
      $region38: #{tpu_custom_call.1} parent=5 // pred_check_branch
        %293 = sbr.rel (%p290) target = $region40
      $region39: #{tpu_custom_call.1} parent=5 // pred_region
        %s294 = ssub.s32 %s20, 1
        %s295 = sand.u32 %s47, 1
        %s296 = scalar_lea.sflag [#allocation3], %s295
        %s297 = sand.u32 %s47, 1
        %s298 = smul.addr %s297, 64
        %s299 = scalar_lea.vmem [#allocation2], %s298
        // Predicated region
        $region41: #{tpu_custom_call.1} parent=39 // pred_check
          %p300 = pneg %p60
        $region42: #{tpu_custom_call.1} parent=39 // pred_check_branch
          %302 = sbr.rel (%p300) target = $region44
        $region43: #{tpu_custom_call.1} parent=39 // pred_region
          %303 = dma.done %s296, 1024
        $region44: #{tpu_custom_call.1} parent=39 // pred_fallthru
          _
        %s304 = sand.u32 %s25, 1
        %s305 = scalar_lea.sflag [#allocation6], %s304
        %s306 = sand.u32 %s73, 1
        %s307 = smul.addr %s306, 64
        %s308 = scalar_lea.vmem [#allocation5], %s307
        // Predicated region
        $region45: #{tpu_custom_call.1} parent=39 // pred_check
          %p309 = pneg %p86
        $region46: #{tpu_custom_call.1} parent=39 // pred_check_branch
          %311 = sbr.rel (%p309) target = $region48
        $region47: #{tpu_custom_call.1} parent=39 // pred_region
          %312 = dma.done %s305, 1024
        $region48: #{tpu_custom_call.1} parent=39 // pred_fallthru
          _
        %s313 = sand.u32 %s25, 1
        %s314 = scalar_lea.sflag [#allocation6], %s313
        %s315 = sand.u32 %s125, 1
        %s316 = smul.addr %s315, 64
        %s317 = scalar_lea.vmem [#allocation7], %s316
        // Predicated region
        $region49: #{tpu_custom_call.1} parent=39 // pred_check
          %p318 = pneg %p138
        $region50: #{tpu_custom_call.1} parent=39 // pred_check_branch
          %320 = sbr.rel (%p318) target = $region52
        $region51: #{tpu_custom_call.1} parent=39 // pred_region
          %321 = dma.done %s314, 1024
        $region52: #{tpu_custom_call.1} parent=39 // pred_fallthru
          _
        %s322 = sand.u32 %s47, 1
        %s323 = scalar_lea.sflag [#allocation3], %s322
        %s324 = sand.u32 %s47, 1
        %s325 = smul.addr %s324, 64
        %s326 = scalar_lea.vmem [#allocation2], %s325
        %p327 = pneg %p60
        %p328 = pneg %p57
        %s329 = sand.u32 %s25, 1
        %s330 = scalar_lea.sflag [#allocation6], %s329
        %s331 = sand.u32 %s73, 1
        %s332 = smul.addr %s331, 64
        %s333 = scalar_lea.vmem [#allocation5], %s332
        %p334 = pneg %p86
        %p335 = pneg %p83
        %p336 = scmp.lt.s32.totalorder %s29, 3
        %s337 = scalar_select %p336, %s29, 3
        %s338 = scalar_lea.vmem %s2, %s337
        %p339 = pneg %p112
        %p340 = pneg %p109
        %s341 = sand.u32 %s25, 1
        %s342 = scalar_lea.sflag [#allocation6], %s341
        %s343 = sand.u32 %s125, 1
        %s344 = smul.addr %s343, 64
        %s345 = scalar_lea.vmem [#allocation7], %s344
        %p346 = pneg %p138
        %p347 = pneg %p135
        %p348 = scmp.lt.s32.totalorder %s29, 3
        %s349 = scalar_select %p348, %s29, 3
        %s350 = scalar_lea.vmem %s4, %s349
        %p351 = pneg %p164
        %p352 = pneg %p161
        %p353 = pneg %p192
        %p354 = pneg %p189
        %s355 = sand.u32 %s179, 1
        %s356 = scalar_lea.sflag [#allocation4], %s355
        %s357 = sand.u32 %s179, 1
        %s358 = smul.addr %s357, 128
        %s359 = scalar_lea.vmem [#allocation8], %s358
        %s360 = smul.u32 16, %s30
        %p361 = scmp.lt.s32.totalorder %s29, 3
        %s362 = scalar_select %p361, %s29, 3
        %s363 = scalar_lea.vmem %s2, %s362
        %p364 = scmp.lt.s32.totalorder %s29, 3
        %s365 = scalar_select %p364, %s29, 3
        %s366 = scalar_lea.vmem %s4, %s365
        %s367 = smul.u32 16, %s30
        %v369 = vld [vmem:[%s299] sm:$0xf]
        %v370 = vld [vmem:[%s299 + $0x4] sm:$0xf]
        %v371 = vld [vmem:[%s299 + $0x8] sm:$0xf]
        %v372 = vld [vmem:[%s299 + $0xc] sm:$0xf]
        %v373 = vld [vmem:[%s299 + $0x10] sm:$0xf]
        %v374 = vld [vmem:[%s299 + $0x14] sm:$0xf]
        %v375 = vld [vmem:[%s299 + $0x18] sm:$0xf]
        %v376 = vld [vmem:[%s299 + $0x1c] sm:$0xf]
        %v377 = vld [vmem:[%s299 + $0x20] sm:$0xf]
        %v378 = vld [vmem:[%s299 + $0x24] sm:$0xf]
        %v379 = vld [vmem:[%s299 + $0x28] sm:$0xf]
        %v380 = vld [vmem:[%s299 + $0x2c] sm:$0xf]
        %v381 = vld [vmem:[%s299 + $0x30] sm:$0xf]
        %v382 = vld [vmem:[%s299 + $0x34] sm:$0xf]
        %v383 = vld [vmem:[%s299 + $0x38] sm:$0xf]
        %v384 = vld [vmem:[%s299 + $0x3c] sm:$0xf]
        %v385 = vld [vmem:[%s308] sm:$0xf]
        %v386 = vld [vmem:[%s308 + $0x4] sm:$0xf]
        %v387 = vld [vmem:[%s308 + $0x8] sm:$0xf]
        %v388 = vld [vmem:[%s308 + $0xc] sm:$0xf]
        %v389 = vld [vmem:[%s308 + $0x10] sm:$0xf]
        %v390 = vld [vmem:[%s308 + $0x14] sm:$0xf]
        %v391 = vld [vmem:[%s308 + $0x18] sm:$0xf]
        %v392 = vld [vmem:[%s308 + $0x1c] sm:$0xf]
        %v393 = vld [vmem:[%s308 + $0x20] sm:$0xf]
        %v394 = vld [vmem:[%s308 + $0x24] sm:$0xf]
        %v395 = vld [vmem:[%s308 + $0x28] sm:$0xf]
        %v396 = vld [vmem:[%s308 + $0x2c] sm:$0xf]
        %v397 = vld [vmem:[%s308 + $0x30] sm:$0xf]
        %v398 = vld [vmem:[%s308 + $0x34] sm:$0xf]
        %v399 = vld [vmem:[%s308 + $0x38] sm:$0xf]
        %v400 = vld [vmem:[%s308 + $0x3c] sm:$0xf]
        %v401 = vld [vmem:[%s363] sm:$0x1]
        %v403 = vlaneseq
        %v404 = vshrl.u32 %v403, 7
        %v405 = vsub.s32 0, %v404
        %v406 = vrot.slane %v401, %v405
        %v424 = vunpack.c.l.b16 %v369
        %v425 = vunpack.c.l.b16 %v370
        %v426 = vunpack.c.l.b16 %v371
        %v427 = vunpack.c.l.b16 %v372
        %v428 = vunpack.c.l.b16 %v373
        %v429 = vunpack.c.l.b16 %v374
        %v430 = vunpack.c.l.b16 %v375
        %v431 = vunpack.c.l.b16 %v376
        %v432 = vunpack.c.l.b16 %v377
        %v433 = vunpack.c.l.b16 %v378
        %v434 = vunpack.c.l.b16 %v379
        %v435 = vunpack.c.l.b16 %v380
        %v436 = vunpack.c.l.b16 %v381
        %v437 = vunpack.c.l.b16 %v382
        %v438 = vunpack.c.l.b16 %v383
        %v439 = vunpack.c.l.b16 %v384
        %v440 = vpack.c.b16 %v425, %v424
        %v441 = vpack.c.b16 %v427, %v426
        %v442 = vpack.c.b16 %v429, %v428
        %v443 = vpack.c.b16 %v431, %v430
        %v444 = vpack.c.b16 %v433, %v432
        %v445 = vpack.c.b16 %v435, %v434
        %v446 = vpack.c.b16 %v437, %v436
        %v447 = vpack.c.b16 %v439, %v438
        %v472 = vunpack.c.l.b16 %v385
        %v473 = vunpack.c.l.b16 %v386
        %v474 = vunpack.c.l.b16 %v387
        %v475 = vunpack.c.l.b16 %v388
        %v476 = vunpack.c.l.b16 %v389
        %v477 = vunpack.c.l.b16 %v390
        %v478 = vunpack.c.l.b16 %v391
        %v479 = vunpack.c.l.b16 %v392
        %v480 = vunpack.c.l.b16 %v393
        %v481 = vunpack.c.l.b16 %v394
        %v482 = vunpack.c.l.b16 %v395
        %v483 = vunpack.c.l.b16 %v396
        %v484 = vunpack.c.l.b16 %v397
        %v485 = vunpack.c.l.b16 %v398
        %v486 = vunpack.c.l.b16 %v399
        %v487 = vunpack.c.l.b16 %v400
        %v488 = vpack.c.b16 %v473, %v472
        %v489 = vpack.c.b16 %v475, %v474
        %v490 = vpack.c.b16 %v477, %v476
        %v491 = vpack.c.b16 %v479, %v478
        %v492 = vpack.c.b16 %v481, %v480
        %v493 = vpack.c.b16 %v483, %v482
        %v494 = vpack.c.b16 %v485, %v484
        %v495 = vpack.c.b16 %v487, %v486
        %504 = vmatprep.subr.bf16.mxu0 0
        %505 = vmatpush1.bf16.msra.mxu0 %v488
        %506 = vmatprep.subr.bf16.mxu0 0
        %507 = vmatpush1.bf16.msra.mxu0 %v489
        %508 = vmatprep.subr.bf16.mxu0 0
        %509 = vmatpush1.bf16.msra.mxu0 %v490
        %510 = vmatprep.subr.bf16.mxu0 0
        %511 = vmatpush1.bf16.msra.mxu0 %v491
        %512 = vmatprep.subr.bf16.mxu0 0
        %513 = vmatpush1.bf16.msra.mxu0 %v492
        %514 = vmatprep.subr.bf16.mxu0 0
        %515 = vmatpush1.bf16.msra.mxu0 %v493
        %516 = vmatprep.subr.bf16.mxu0 0
        %517 = vmatpush1.bf16.msra.mxu0 %v494
        %518 = vmatprep.subr.bf16.mxu0 0
        %519 = vmatpush1.bf16.msra.mxu0 %v495
        %520 = vmatprep.subr.bf16.mxu0 0
        %521 = vmatpush1.bf16.msra.mxu0 0
        %522 = vmatprep.subr.bf16.mxu0 0
        %523 = vmatpush1.bf16.msra.mxu0 0
        %524 = vmatprep.subr.bf16.mxu0 0
        %525 = vmatpush1.bf16.msra.mxu0 0
        %526 = vmatprep.subr.bf16.mxu0 0
        %527 = vmatpush1.bf16.msra.mxu0 0
        %528 = vmatprep.subr.bf16.mxu0 0
        %529 = vmatpush1.bf16.msra.mxu0 0
        %530 = vmatprep.subr.bf16.mxu0 0
        %531 = vmatpush1.bf16.msra.mxu0 0
        %532 = vmatprep.subr.bf16.mxu0 0
        %533 = vmatpush1.bf16.msra.mxu0 0
        %534 = vmatprep.subr.bf16.mxu0 0
        %535 = vmatpush1.bf16.msra.mxu0 0
        %536 = vmatprep.mubr.bf16.mxu0 0
        %537 = vmatmul.mubr.bf16.gmra.mrb[0].mxu0 %v440
        %v538 = vpop.f32.mrb[0].mxu0
        %v539 = vadd.f32 %v406, %v538
        %v540 = vpop.f32.mrb[0].mxu0
        %v541 = vpop.f32.mrb[0].mxu0
        %v542 = vadd.f32 %v406, %v541
        %v543 = vpop.f32.mrb[0].mxu0
        %544 = vmatprep.mubr.bf16.mxu0 0
        %545 = vmatmul.mubr.bf16.gmra.mrb[0].mxu0 %v441
        %v546 = vpop.f32.mrb[0].mxu0
        %v547 = vadd.f32 %v406, %v546
        %v548 = vpop.f32.mrb[0].mxu0
        %v549 = vpop.f32.mrb[0].mxu0
        %v550 = vadd.f32 %v406, %v549
        %v551 = vpop.f32.mrb[0].mxu0
        %552 = vmatprep.mubr.bf16.mxu0 0
        %553 = vmatmul.mubr.bf16.gmra.mrb[0].mxu0 %v442
        %v554 = vpop.f32.mrb[0].mxu0
        %v555 = vadd.f32 %v406, %v554
        %v556 = vpop.f32.mrb[0].mxu0
        %v557 = vpop.f32.mrb[0].mxu0
        %v558 = vadd.f32 %v406, %v557
        %v559 = vpop.f32.mrb[0].mxu0
        %560 = vmatprep.mubr.bf16.mxu0 0
        %561 = vmatmul.mubr.bf16.gmra.mrb[0].mxu0 %v443
        %v562 = vpop.f32.mrb[0].mxu0
        %v563 = vadd.f32 %v406, %v562
        %v564 = vpop.f32.mrb[0].mxu0
        %v565 = vpop.f32.mrb[0].mxu0
        %v566 = vadd.f32 %v406, %v565
        %v567 = vpop.f32.mrb[0].mxu0
        %568 = vmatprep.mubr.bf16.mxu0 0
        %569 = vmatmul.mubr.bf16.gmra.mrb[0].mxu0 %v444
        %v570 = vpop.f32.mrb[0].mxu0
        %v571 = vadd.f32 %v406, %v570
        %v572 = vpop.f32.mrb[0].mxu0
        %v573 = vpop.f32.mrb[0].mxu0
        %v574 = vadd.f32 %v406, %v573
        %v575 = vpop.f32.mrb[0].mxu0
        %576 = vmatprep.mubr.bf16.mxu0 0
        %577 = vmatmul.mubr.bf16.gmra.mrb[0].mxu0 %v445
        %v578 = vpop.f32.mrb[0].mxu0
        %v579 = vadd.f32 %v406, %v578
        %v580 = vpop.f32.mrb[0].mxu0
        %v581 = vpop.f32.mrb[0].mxu0
        %v582 = vadd.f32 %v406, %v581
        %v583 = vpop.f32.mrb[0].mxu0
        %584 = vmatprep.mubr.bf16.mxu0 0
        %585 = vmatmul.mubr.bf16.gmra.mrb[0].mxu0 %v446
        %v586 = vpop.f32.mrb[0].mxu0
        %v587 = vadd.f32 %v406, %v586
        %v588 = vpop.f32.mrb[0].mxu0
        %v589 = vpop.f32.mrb[0].mxu0
        %v590 = vadd.f32 %v406, %v589
        %v591 = vpop.f32.mrb[0].mxu0
        %592 = vmatprep.mubr.bf16.mxu0 0
        %593 = vmatmul.mubr.bf16.gmra.mrb[0].mxu0 %v447
        %v594 = vpop.f32.mrb[0].mxu0
        %v595 = vadd.f32 %v406, %v594
        %v596 = vpop.f32.mrb[0].mxu0
        %v597 = vpop.f32.mrb[0].mxu0
        %v598 = vadd.f32 %v406, %v597
        %v599 = vpop.f32.mrb[0].mxu0
        %600 = vdwg.mxu0
        %v601 = vmax.f32 %v539, 0.0
        %v602 = vmax.f32 %v542, 0.0
        %v603 = vmax.f32 %v547, 0.0
        %v604 = vmax.f32 %v550, 0.0
        %v605 = vmax.f32 %v555, 0.0
        %v606 = vmax.f32 %v558, 0.0
        %v607 = vmax.f32 %v563, 0.0
        %v608 = vmax.f32 %v566, 0.0
        %v609 = vmax.f32 %v571, 0.0
        %v610 = vmax.f32 %v574, 0.0
        %v611 = vmax.f32 %v579, 0.0
        %v612 = vmax.f32 %v582, 0.0
        %v613 = vmax.f32 %v587, 0.0
        %v614 = vmax.f32 %v590, 0.0
        %v615 = vmax.f32 %v595, 0.0
        %v616 = vmax.f32 %v598, 0.0
        %v617 = vpack.c.bf16 %v602, %v601
        %v618 = vpack.c.bf16 %v604, %v603
        %v619 = vpack.c.bf16 %v606, %v605
        %v620 = vpack.c.bf16 %v608, %v607
        %v621 = vpack.c.bf16 %v610, %v609
        %v622 = vpack.c.bf16 %v612, %v611
        %v623 = vpack.c.bf16 %v614, %v613
        %v624 = vpack.c.bf16 %v616, %v615
        %v625 = vld [vmem:[%s317] sm:$0xf]
        %v626 = vld [vmem:[%s317 + $0x4] sm:$0xf]
        %v627 = vld [vmem:[%s317 + $0x8] sm:$0xf]
        %v628 = vld [vmem:[%s317 + $0xc] sm:$0xf]
        %v629 = vld [vmem:[%s317 + $0x10] sm:$0xf]
        %v630 = vld [vmem:[%s317 + $0x14] sm:$0xf]
        %v631 = vld [vmem:[%s317 + $0x18] sm:$0xf]
        %v632 = vld [vmem:[%s317 + $0x1c] sm:$0xf]
        %v633 = vld [vmem:[%s317 + $0x20] sm:$0xf]
        %v634 = vld [vmem:[%s317 + $0x24] sm:$0xf]
        %v635 = vld [vmem:[%s317 + $0x28] sm:$0xf]
        %v636 = vld [vmem:[%s317 + $0x2c] sm:$0xf]
        %v637 = vld [vmem:[%s317 + $0x30] sm:$0xf]
        %v638 = vld [vmem:[%s317 + $0x34] sm:$0xf]
        %v639 = vld [vmem:[%s317 + $0x38] sm:$0xf]
        %v640 = vld [vmem:[%s317 + $0x3c] sm:$0xf]
        %v641 = vld [vmem:[%s366] sm:$0x1]
        %v643 = vlaneseq
        %v644 = vshrl.u32 %v643, 7
        %v645 = vsub.s32 0, %v644
        %v646 = vrot.slane %v641, %v645
        %v664 = vunpack.c.l.b16 %v625
        %v665 = vunpack.c.l.b16 %v626
        %v666 = vunpack.c.l.b16 %v627
        %v667 = vunpack.c.l.b16 %v628
        %v668 = vunpack.c.l.b16 %v629
        %v669 = vunpack.c.l.b16 %v630
        %v670 = vunpack.c.l.b16 %v631
        %v671 = vunpack.c.l.b16 %v632
        %v672 = vunpack.c.l.b16 %v633
        %v673 = vunpack.c.l.b16 %v634
        %v674 = vunpack.c.l.b16 %v635
        %v675 = vunpack.c.l.b16 %v636
        %v676 = vunpack.c.l.b16 %v637
        %v677 = vunpack.c.l.b16 %v638
        %v678 = vunpack.c.l.b16 %v639
        %v679 = vunpack.c.l.b16 %v640
        %v680 = vpack.c.b16 %v665, %v664
        %v681 = vpack.c.b16 %v667, %v666
        %v682 = vpack.c.b16 %v669, %v668
        %v683 = vpack.c.b16 %v671, %v670
        %v684 = vpack.c.b16 %v673, %v672
        %v685 = vpack.c.b16 %v675, %v674
        %v686 = vpack.c.b16 %v677, %v676
        %v687 = vpack.c.b16 %v679, %v678
        %696 = vmatprep.subr.bf16.mxu0 0
        %697 = vmatpush1.bf16.msra.mxu0 %v680
        %698 = vmatprep.subr.bf16.mxu0 0
        %699 = vmatpush1.bf16.msra.mxu0 %v681
        %700 = vmatprep.subr.bf16.mxu0 0
        %701 = vmatpush1.bf16.msra.mxu0 %v682
        %702 = vmatprep.subr.bf16.mxu0 0
        %703 = vmatpush1.bf16.msra.mxu0 %v683
        %704 = vmatprep.subr.bf16.mxu0 0
        %705 = vmatpush1.bf16.msra.mxu0 %v684
        %706 = vmatprep.subr.bf16.mxu0 0
        %707 = vmatpush1.bf16.msra.mxu0 %v685
        %708 = vmatprep.subr.bf16.mxu0 0
        %709 = vmatpush1.bf16.msra.mxu0 %v686
        %710 = vmatprep.subr.bf16.mxu0 0
        %711 = vmatpush1.bf16.msra.mxu0 %v687
        %712 = vmatprep.subr.bf16.mxu0 0
        %713 = vmatpush1.bf16.msra.mxu0 0
        %714 = vmatprep.subr.bf16.mxu0 0
        %715 = vmatpush1.bf16.msra.mxu0 0
        %716 = vmatprep.subr.bf16.mxu0 0
        %717 = vmatpush1.bf16.msra.mxu0 0
        %718 = vmatprep.subr.bf16.mxu0 0
        %719 = vmatpush1.bf16.msra.mxu0 0
        %720 = vmatprep.subr.bf16.mxu0 0
        %721 = vmatpush1.bf16.msra.mxu0 0
        %722 = vmatprep.subr.bf16.mxu0 0
        %723 = vmatpush1.bf16.msra.mxu0 0
        %724 = vmatprep.subr.bf16.mxu0 0
        %725 = vmatpush1.bf16.msra.mxu0 0
        %726 = vmatprep.subr.bf16.mxu0 0
        %727 = vmatpush1.bf16.msra.mxu0 0
        %728 = vmatprep.mubr.bf16.mxu0 0
        %729 = vmatmul.mubr.bf16.gmra.mrb[0].mxu0 %v617
        %v730 = vpop.f32.mrb[0].mxu0
        %v731 = vadd.f32 %v646, %v730
        %v732 = vpop.f32.mrb[0].mxu0
        %v733 = vpop.f32.mrb[0].mxu0
        %v734 = vadd.f32 %v646, %v733
        %v735 = vpop.f32.mrb[0].mxu0
        %736 = vmatprep.mubr.bf16.mxu0 0
        %737 = vmatmul.mubr.bf16.gmra.mrb[0].mxu0 %v618
        %v738 = vpop.f32.mrb[0].mxu0
        %v739 = vadd.f32 %v646, %v738
        %v740 = vpop.f32.mrb[0].mxu0
        %v741 = vpop.f32.mrb[0].mxu0
        %v742 = vadd.f32 %v646, %v741
        %v743 = vpop.f32.mrb[0].mxu0
        %744 = vmatprep.mubr.bf16.mxu0 0
        %745 = vmatmul.mubr.bf16.gmra.mrb[0].mxu0 %v619
        %v746 = vpop.f32.mrb[0].mxu0
        %v747 = vadd.f32 %v646, %v746
        %v748 = vpop.f32.mrb[0].mxu0
        %v749 = vpop.f32.mrb[0].mxu0
        %v750 = vadd.f32 %v646, %v749
        %v751 = vpop.f32.mrb[0].mxu0
        %752 = vmatprep.mubr.bf16.mxu0 0
        %753 = vmatmul.mubr.bf16.gmra.mrb[0].mxu0 %v620
        %v754 = vpop.f32.mrb[0].mxu0
        %v755 = vadd.f32 %v646, %v754
        %v756 = vpop.f32.mrb[0].mxu0
        %v757 = vpop.f32.mrb[0].mxu0
        %v758 = vadd.f32 %v646, %v757
        %v759 = vpop.f32.mrb[0].mxu0
        %760 = vmatprep.mubr.bf16.mxu0 0
        %761 = vmatmul.mubr.bf16.gmra.mrb[0].mxu0 %v621
        %v762 = vpop.f32.mrb[0].mxu0
        %v763 = vadd.f32 %v646, %v762
        %v764 = vpop.f32.mrb[0].mxu0
        %v765 = vpop.f32.mrb[0].mxu0
        %v766 = vadd.f32 %v646, %v765
        %v767 = vpop.f32.mrb[0].mxu0
        %768 = vmatprep.mubr.bf16.mxu0 0
        %769 = vmatmul.mubr.bf16.gmra.mrb[0].mxu0 %v622
        %v770 = vpop.f32.mrb[0].mxu0
        %v771 = vadd.f32 %v646, %v770
        %v772 = vpop.f32.mrb[0].mxu0
        %v773 = vpop.f32.mrb[0].mxu0
        %v774 = vadd.f32 %v646, %v773
        %v775 = vpop.f32.mrb[0].mxu0
        %776 = vmatprep.mubr.bf16.mxu0 0
        %777 = vmatmul.mubr.bf16.gmra.mrb[0].mxu0 %v623
        %v778 = vpop.f32.mrb[0].mxu0
        %v779 = vadd.f32 %v646, %v778
        %v780 = vpop.f32.mrb[0].mxu0
        %v781 = vpop.f32.mrb[0].mxu0
        %v782 = vadd.f32 %v646, %v781
        %v783 = vpop.f32.mrb[0].mxu0
        %784 = vmatprep.mubr.bf16.mxu0 0
        %785 = vmatmul.mubr.bf16.gmra.mrb[0].mxu0 %v624
        %v786 = vpop.f32.mrb[0].mxu0
        %v787 = vadd.f32 %v646, %v786
        %v788 = vpop.f32.mrb[0].mxu0
        %v789 = vpop.f32.mrb[0].mxu0
        %v790 = vadd.f32 %v646, %v789
        %v791 = vpop.f32.mrb[0].mxu0
        %792 = vdwg.mxu0
        %793 = vst [vmem:[%s359] sm:$0xff] %v731
        %794 = vst [vmem:[%s359 + $0x8] sm:$0xff] %v734
        %795 = vst [vmem:[%s359 + $0x10] sm:$0xff] %v739
        %796 = vst [vmem:[%s359 + $0x18] sm:$0xff] %v742
        %797 = vst [vmem:[%s359 + $0x20] sm:$0xff] %v747
        %798 = vst [vmem:[%s359 + $0x28] sm:$0xff] %v750
        %799 = vst [vmem:[%s359 + $0x30] sm:$0xff] %v755
        %800 = vst [vmem:[%s359 + $0x38] sm:$0xff] %v758
        %801 = vst [vmem:[%s359 + $0x40] sm:$0xff] %v763
        %802 = vst [vmem:[%s359 + $0x48] sm:$0xff] %v766
        %803 = vst [vmem:[%s359 + $0x50] sm:$0xff] %v771
        %804 = vst [vmem:[%s359 + $0x58] sm:$0xff] %v774
        %805 = vst [vmem:[%s359 + $0x60] sm:$0xff] %v779
        %806 = vst [vmem:[%s359 + $0x68] sm:$0xff] %v782
        %807 = vst [vmem:[%s359 + $0x70] sm:$0xff] %v787
        %808 = vst [vmem:[%s359 + $0x78] sm:$0xff] %v790
        %s809 = sand.u32 %s179, 1
        %s810 = scalar_lea.sflag [#allocation4], %s809
        %s811 = sand.u32 %s179, 1
        %s812 = smul.addr %s811, 128
        %s813 = scalar_lea.vmem [#allocation8], %s812
        // Predicated region
        $region53: #{tpu_custom_call.1} parent=39 // pred_check
          %p814 = pneg %p189
        $region54: #{tpu_custom_call.1} parent=39 // pred_check_branch
          %816 = sbr.rel (%p814) target = $region56
        $region55: #{tpu_custom_call.1} parent=39 // pred_region
          %s817 = smul.u32 16, %s30
          %s819 = ssub.s32 2048, 2048
          %820 = vsyncadd %s810, %s819
          %s821 = smul.addr %s29, 16
          %s822 = sadd.s32 %s817, %s821
          %s823 = smul.addr %s822, 128
          %s824 = scalar_lea.hbm %s5, %s823
          %s825 = sshll.u32 %s813, 4
          %s826 = int_to_ptr.vmem [resolvable:$true] %s825
          %831 = dma.vmem_to_hbm [thread:$0]  %s826, 2048, %s824, %s810, 128, 128, 8
        $region56: #{tpu_custom_call.1} parent=39 // pred_fallthru
          _
      $region40: #{tpu_custom_call.1} parent=5 // pred_fallthru
        _
      %p832 = scmp.le.s32.totalorder 2, %s20
      // Predicated region
      $region57: #{tpu_custom_call.1} parent=5 // pred_check
        %p833 = pneg %p832
      $region58: #{tpu_custom_call.1} parent=5 // pred_check_branch
        %835 = sbr.rel (%p833) target = $region60
      $region59: #{tpu_custom_call.1} parent=5 // pred_region
        %s836 = ssub.s32 %s20, 2
        // Predicated region
        $region61: #{tpu_custom_call.1} parent=59 // pred_check
          %p837 = pneg %p195
        $region62: #{tpu_custom_call.1} parent=59 // pred_check_branch
          %839 = sbr.rel (%p837) target = $region64
        $region63: #{tpu_custom_call.1} parent=59 // pred_region
          %s840 = sand.u32 %s180, 1
          %s841 = scalar_lea.sflag [#allocation4], %s840
          %s842 = sand.u32 %s180, 1
          %s843 = smul.addr %s842, 128
          %s844 = scalar_lea.vmem [#allocation8], %s843
          %845 = dma.done %s841, 2048
        $region64: #{tpu_custom_call.1} parent=59 // pred_fallthru
          _
      $region60: #{tpu_custom_call.1} parent=5 // pred_fallthru
        _
    $region6: #{tpu_custom_call.1} parent=1 // loop_footer
      %s24 = sadd.s32 1, %s20
    $region7: #{tpu_custom_call.1} parent=1 // loop_footer_branch
      %19 = sbr.rel target = $region3
    $region8: #{tpu_custom_call.1} parent=1 // loop_exit
      _
    %846 = vsyncpa [#allocation3], 1
    %s847 = scalar_lea.sflag [#allocation3], 1
    %848 = vsyncpa %s847, 1
    %849 = vsyncpa [#allocation6], 1
    %s850 = scalar_lea.sflag [#allocation6], 1
    %851 = vsyncpa %s850, 1
    %852 = vsyncpa [#allocation4], 1
    %s853 = scalar_lea.sflag [#allocation4], 1
    %854 = vsyncpa %s853, 1

</llo_original>
